<compile_context>
chip_gen: v6e
topology: v6e:2x2x1
jax: 0.10.0
libtpu: 0.0.40
codegen_flags: <defaults>
</compile_context>

<pallas_src>
import functools

import jax
import jax.numpy as jnp
from jax.experimental import pallas as pl
from jax.experimental.pallas import tpu as pltpu

NUM_SPEED, NUM_LANE, NUM_DIST = 4, 4, 5
STATE_DIM = NUM_SPEED * NUM_LANE * NUM_DIST ** 4          # 10000
ACTION_DIM = 5
OUT_PAD = 128                                             # lane-dense output width
ENC_WEIGHTS = (NUM_LANE * NUM_DIST ** 4, NUM_DIST ** 4, NUM_DIST ** 3,
               NUM_DIST ** 2, NUM_DIST, 1)                # (2500, 625, 125, 25, 5, 1)


def _qfunction_kernel(tb, idx_ref, t1_ref, b1_ref, w2_ref, b2_ref,
                      w3_ref, b3_ref, w4_ref, b4_ref, out_ref, xbuf):
    """One batch tile: VMEM row-gather from the folded table, then the MLP."""
    base = pl.program_id(0) * tb

    # ---- embedding gather: dynamic-slice reads from the VMEM-resident table ----
    # idx lives in SMEM (scalar prefetch); the table block index is constant so it
    # is DMA'd to VMEM once and reused across all grid steps.
    @pl.loop(0, tb, unroll=(tb <= 128))
    def _(r):
        row = idx_ref[base + r]                            # scalar from SMEM
        xbuf[pl.ds(r, 1), :] = t1_ref[pl.ds(row, 1), :]    # (1, hidden) VMEM copy

    # ---- MLP.  First Linear is folded into the table: x@w1 == (emb@w1)[idx]. ----
    h = jnp.maximum(xbuf[...] + b1_ref[...], 0.0)
    h = jnp.maximum(jnp.dot(h, w2_ref[...], preferred_element_type=jnp.float32)
                    + b2_ref[...], 0.0)
    h = jnp.maximum(jnp.dot(h, w3_ref[...], preferred_element_type=jnp.float32)
                    + b3_ref[...], 0.0)
    out_ref[...] = (jnp.dot(h, w4_ref[...], preferred_element_type=jnp.float32)
                    + b4_ref[...])                         # (tb, 128); cols >=5 are 0


def prepare_params(params):
    """One-time parameter preparation (call once, reuse across forward calls)."""
    emb, w1, b1, w2, b2, w3, b3, w4, b4 = params
    hidden = w1.shape[1]
    # Fold the first Linear into the embedding table: (emb @ w1)[idx] == emb[idx] @ w1.
    table1 = jnp.dot(emb.astype(jnp.float32), w1.astype(jnp.float32),
                     preferred_element_type=jnp.float32)   # (STATE_DIM, hidden)
    # Lane-dense output head: zero-pad the 5-wide head to 128 lanes.
    w4p = jnp.zeros((hidden, OUT_PAD), jnp.float32).at[:, :ACTION_DIM].set(w4)
    b4p = jnp.zeros((1, OUT_PAD), jnp.float32).at[:, :ACTION_DIM].set(b4)
    return (table1, b1, w2, b2, w3, b3, w4p, b4p)


def qfunction_forward(state, prepared, *, block_b=512):
    """state: (B, 6) int32; prepared: output of prepare_params()."""
    table1, b1, w2, b2, w3, b3, w4p, b4p = prepared
    batch = state.shape[0]
    hidden = w2.shape[0]

    # ---- encode_discrete: mixed-radix encode (tiny scalar work in the wrapper;
    # ---- result rides into kernel SMEM via scalar prefetch) --------------------
    s = state.astype(jnp.int32).at[:, 0].add(-1)           # state[:, 0] -= 1
    idx = s @ jnp.array(ENC_WEIGHTS, dtype=jnp.int32)      # (B,) mixed-radix index
    idx = jnp.clip(idx, 0, STATE_DIM - 1)                  # guard OOB VMEM reads

    # ---- batch tiling: large tiles to amortize per-step overhead, but keep >=2
    # ---- grid steps when the batch allows (v7x megacore) -----------------------
    bt8 = max(8, ((batch + 7) // 8) * 8)
    tb = min(block_b, bt8)
    if bt8 >= 16:
        tb = min(tb, max(8, ((bt8 // 2 + 7) // 8) * 8))
    padded_b = ((batch + tb - 1) // tb) * tb
    if padded_b != batch:
        idx = jnp.pad(idx, (0, padded_b - batch))          # pad rows gather row 0
    grid = (padded_b // tb,)

    weights = (table1, b1, w2, b2, w3, b3, w4p, b4p)

    def full_spec(a):
        nd = a.ndim
        return pl.BlockSpec(a.shape, lambda i, idx_ref, _nd=nd: (0,) * _nd)

    out = pl.pallas_call(
        functools.partial(_qfunction_kernel, tb),
        out_shape=jax.ShapeDtypeStruct((padded_b, OUT_PAD), jnp.float32),
        grid_spec=pltpu.PrefetchScalarGridSpec(
            num_scalar_prefetch=1,                          # idx -> SMEM
            grid=grid,
            in_specs=[full_spec(a) for a in weights],       # table + weights in VMEM
            out_specs=pl.BlockSpec((tb, OUT_PAD), lambda i, idx_ref: (i, 0)),
            scratch_shapes=[pltpu.VMEM((tb, hidden), jnp.float32)]),
        compiler_params=pltpu.CompilerParams(
            dimension_semantics=("parallel",),
            vmem_limit_bytes=32 * 1024 * 1024),
    )(idx, *weights)

    return out[:batch, :ACTION_DIM]


def init_params(key, state_embed_dim, hidden_dim):
    """Deterministic synthetic parameters (shapes match the PyTorch module)."""
    ks = jax.random.split(key, 9)
    emb = jax.random.normal(ks[0], (STATE_DIM, state_embed_dim), jnp.float32) * 0.1
    w1 = jax.random.normal(ks[1], (state_embed_dim, hidden_dim), jnp.float32) * 0.1
    b1 = jax.random.normal(ks[2], (1, hidden_dim), jnp.float32) * 0.01
    w2 = jax.random.normal(ks[3], (hidden_dim, hidden_dim), jnp.float32) * 0.1
    b2 = jax.random.normal(ks[4], (1, hidden_dim), jnp.float32) * 0.01
    w3 = jax.random.normal(ks[5], (hidden_dim, hidden_dim), jnp.float32) * 0.1
    b3 = jax.random.normal(ks[6], (1, hidden_dim), jnp.float32) * 0.01
    w4 = jax.random.normal(ks[7], (hidden_dim, ACTION_DIM), jnp.float32) * 0.1
    b4 = jax.random.normal(ks[8], (1, ACTION_DIM), jnp.float32) * 0.01
    return emb, w1, b1, w2, b2, w3, b3, w4, b4


def reference_forward(state, params):
    """Pure-JAX reference mirroring the PyTorch forward (discrete mode)."""
    emb, w1, b1, w2, b2, w3, b3, w4, b4 = params
    s = state.at[:, 0].add(-1)
    idx = s @ jnp.array(ENC_WEIGHTS, dtype=jnp.int32)
    x = emb[idx]
    h = jnp.maximum(x @ w1 + b1, 0.0)
    h = jnp.maximum(h @ w2 + b2, 0.0)
    h = jnp.maximum(h @ w3 + b3, 0.0)
    return h @ w4 + b4


if __name__ == "__main__":
    B = 8
    STATE_EMBED_DIM = 32
    HIDDEN_DIM = 32

    key = jax.random.PRNGKey(0)
    k_param, k_speed, k_lane, k_dist = jax.random.split(key, 4)

    params = init_params(k_param, STATE_EMBED_DIM, HIDDEN_DIM)
    prepared = prepare_params(params)

    # Discrete state: [speed in 1..4, lane in 0..3, four distances in 0..4]
    speed = jax.random.randint(k_speed, (B, 1), 1, NUM_SPEED + 1, dtype=jnp.int32)
    lane = jax.random.randint(k_lane, (B, 1), 0, NUM_LANE, dtype=jnp.int32)
    dists = jax.random.randint(k_dist, (B, 4), 0, NUM_DIST, dtype=jnp.int32)
    state = jnp.concatenate([speed, lane, dists], axis=1)     # (B, 6) int32

    q_pallas = qfunction_forward(state, prepared)
    jax.block_until_ready(q_pallas)

    q_ref = reference_forward(state, params)
    assert q_pallas.shape == (B, ACTION_DIM)
    max_err = jnp.max(jnp.abs(q_pallas - q_ref))
    assert jnp.allclose(q_pallas, q_ref, atol=1e-4, rtol=1e-4), (
        f"mismatch: max abs err {max_err}")

    print("KERNEL_OK")
</pallas_src>

<mosaic_0001>
module attributes {stable_mosaic.version = 11 : i64} {
  func.func @_qfunction_kernel(%arg0: i32, %arg1: memref<8xi32, #tpu.memory_space<smem>>, %arg2: memref<10000x32xf32, #tpu.memory_space<vmem>>, %arg3: memref<1x32xf32, #tpu.memory_space<vmem>>, %arg4: memref<32x32xf32, #tpu.memory_space<vmem>>, %arg5: memref<1x32xf32, #tpu.memory_space<vmem>>, %arg6: memref<32x32xf32, #tpu.memory_space<vmem>>, %arg7: memref<1x32xf32, #tpu.memory_space<vmem>>, %arg8: memref<32x128xf32, #tpu.memory_space<vmem>>, %arg9: memref<1x128xf32, #tpu.memory_space<vmem>>, %arg10: memref<8x128xf32, #tpu.memory_space<vmem>>, %arg11: memref<8x32xf32, #tpu.memory_space<vmem>>) attributes {dimension_semantics = [#tpu.dimension_semantics<parallel>], iteration_bounds = array<i64: 1>, scalar_prefetch = 1 : i64, scratch_operands = 1 : i64, tpu.core_type = #tpu.core_type<tc>, window_params = [{pipeline_mode = #tpu.pipeline_mode<synchronous>, transform_indices = @transform_0, window_bounds = array<i64: 10000, 32>}, {pipeline_mode = #tpu.pipeline_mode<synchronous>, transform_indices = @transform_1, window_bounds = array<i64: 1, 32>}, {pipeline_mode = #tpu.pipeline_mode<synchronous>, transform_indices = @transform_2, window_bounds = array<i64: 32, 32>}, {pipeline_mode = #tpu.pipeline_mode<synchronous>, transform_indices = @transform_3, window_bounds = array<i64: 1, 32>}, {pipeline_mode = #tpu.pipeline_mode<synchronous>, transform_indices = @transform_4, window_bounds = array<i64: 32, 32>}, {pipeline_mode = #tpu.pipeline_mode<synchronous>, transform_indices = @transform_5, window_bounds = array<i64: 1, 32>}, {pipeline_mode = #tpu.pipeline_mode<synchronous>, transform_indices = @transform_6, window_bounds = array<i64: 32, 128>}, {pipeline_mode = #tpu.pipeline_mode<synchronous>, transform_indices = @transform_7, window_bounds = array<i64: 1, 128>}, {transform_indices = @transform_8, window_bounds = array<i64: 8, 128>}]} {
    %c8_i32 = arith.constant 8 : i32
    %0 = arith.muli %arg0, %c8_i32 : i32
    %c0_i32 = arith.constant 0 : i32
    %c1_i32 = arith.constant 1 : i32
    %1 = arith.muli %c0_i32, %c1_i32 : i32
    %c0_i32_0 = arith.constant 0 : i32
    %2 = arith.addi %c0_i32_0, %1 : i32
    %3 = arith.addi %0, %2 : i32
    %4 = arith.index_cast %3 : i32 to index
    %5 = memref.load %arg1[%4] : memref<8xi32, #tpu.memory_space<smem>>
    %6 = arith.index_cast %5 : i32 to index
    %c0 = arith.constant 0 : index
    %7 = vector.load %arg2[%6, %c0] : memref<10000x32xf32, #tpu.memory_space<vmem>>, vector<1x32xf32>
    %8 = arith.index_cast %2 : i32 to index
    %c0_1 = arith.constant 0 : index
    %9 = vector.load %arg11[%8, %c0_1] : memref<8x32xf32, #tpu.memory_space<vmem>>, vector<1x32xf32>
    tpu.vector_store %arg11[%8, %c0_1], %7 {strides = array<i32>} : memref<8x32xf32, #tpu.memory_space<vmem>>, vector<1x32xf32>,
    %c1_i32_2 = arith.constant 1 : i32
    %c1_i32_3 = arith.constant 1 : i32
    %10 = arith.muli %c1_i32_2, %c1_i32_3 : i32
    %c0_i32_4 = arith.constant 0 : i32
    %11 = arith.addi %c0_i32_4, %10 : i32
    %12 = arith.addi %0, %11 : i32
    %13 = arith.index_cast %12 : i32 to index
    %14 = memref.load %arg1[%13] : memref<8xi32, #tpu.memory_space<smem>>
    %15 = arith.index_cast %14 : i32 to index
    %c0_5 = arith.constant 0 : index
    %16 = vector.load %arg2[%15, %c0_5] : memref<10000x32xf32, #tpu.memory_space<vmem>>, vector<1x32xf32>
    %17 = arith.index_cast %11 : i32 to index
    %c0_6 = arith.constant 0 : index
    %18 = vector.load %arg11[%17, %c0_6] : memref<8x32xf32, #tpu.memory_space<vmem>>, vector<1x32xf32>
    tpu.vector_store %arg11[%17, %c0_6], %16 {strides = array<i32>} : memref<8x32xf32, #tpu.memory_space<vmem>>, vector<1x32xf32>,
    %c2_i32 = arith.constant 2 : i32
    %c1_i32_7 = arith.constant 1 : i32
    %19 = arith.muli %c2_i32, %c1_i32_7 : i32
    %c0_i32_8 = arith.constant 0 : i32
    %20 = arith.addi %c0_i32_8, %19 : i32
    %21 = arith.addi %0, %20 : i32
    %22 = arith.index_cast %21 : i32 to index
    %23 = memref.load %arg1[%22] : memref<8xi32, #tpu.memory_space<smem>>
    %24 = arith.index_cast %23 : i32 to index
    %c0_9 = arith.constant 0 : index
    %25 = vector.load %arg2[%24, %c0_9] : memref<10000x32xf32, #tpu.memory_space<vmem>>, vector<1x32xf32>
    %26 = arith.index_cast %20 : i32 to index
    %c0_10 = arith.constant 0 : index
    %27 = vector.load %arg11[%26, %c0_10] : memref<8x32xf32, #tpu.memory_space<vmem>>, vector<1x32xf32>
    tpu.vector_store %arg11[%26, %c0_10], %25 {strides = array<i32>} : memref<8x32xf32, #tpu.memory_space<vmem>>, vector<1x32xf32>,
    %c3_i32 = arith.constant 3 : i32
    %c1_i32_11 = arith.constant 1 : i32
    %28 = arith.muli %c3_i32, %c1_i32_11 : i32
    %c0_i32_12 = arith.constant 0 : i32
    %29 = arith.addi %c0_i32_12, %28 : i32
    %30 = arith.addi %0, %29 : i32
    %31 = arith.index_cast %30 : i32 to index
    %32 = memref.load %arg1[%31] : memref<8xi32, #tpu.memory_space<smem>>
    %33 = arith.index_cast %32 : i32 to index
    %c0_13 = arith.constant 0 : index
    %34 = vector.load %arg2[%33, %c0_13] : memref<10000x32xf32, #tpu.memory_space<vmem>>, vector<1x32xf32>
    %35 = arith.index_cast %29 : i32 to index
    %c0_14 = arith.constant 0 : index
    %36 = vector.load %arg11[%35, %c0_14] : memref<8x32xf32, #tpu.memory_space<vmem>>, vector<1x32xf32>
    tpu.vector_store %arg11[%35, %c0_14], %34 {strides = array<i32>} : memref<8x32xf32, #tpu.memory_space<vmem>>, vector<1x32xf32>,
    %c4_i32 = arith.constant 4 : i32
    %c1_i32_15 = arith.constant 1 : i32
    %37 = arith.muli %c4_i32, %c1_i32_15 : i32
    %c0_i32_16 = arith.constant 0 : i32
    %38 = arith.addi %c0_i32_16, %37 : i32
    %39 = arith.addi %0, %38 : i32
    %40 = arith.index_cast %39 : i32 to index
    %41 = memref.load %arg1[%40] : memref<8xi32, #tpu.memory_space<smem>>
    %42 = arith.index_cast %41 : i32 to index
    %c0_17 = arith.constant 0 : index
    %43 = vector.load %arg2[%42, %c0_17] : memref<10000x32xf32, #tpu.memory_space<vmem>>, vector<1x32xf32>
    %44 = arith.index_cast %38 : i32 to index
    %c0_18 = arith.constant 0 : index
    %45 = vector.load %arg11[%44, %c0_18] : memref<8x32xf32, #tpu.memory_space<vmem>>, vector<1x32xf32>
    tpu.vector_store %arg11[%44, %c0_18], %43 {strides = array<i32>} : memref<8x32xf32, #tpu.memory_space<vmem>>, vector<1x32xf32>,
    %c5_i32 = arith.constant 5 : i32
    %c1_i32_19 = arith.constant 1 : i32
    %46 = arith.muli %c5_i32, %c1_i32_19 : i32
    %c0_i32_20 = arith.constant 0 : i32
    %47 = arith.addi %c0_i32_20, %46 : i32
    %48 = arith.addi %0, %47 : i32
    %49 = arith.index_cast %48 : i32 to index
    %50 = memref.load %arg1[%49] : memref<8xi32, #tpu.memory_space<smem>>
    %51 = arith.index_cast %50 : i32 to index
    %c0_21 = arith.constant 0 : index
    %52 = vector.load %arg2[%51, %c0_21] : memref<10000x32xf32, #tpu.memory_space<vmem>>, vector<1x32xf32>
    %53 = arith.index_cast %47 : i32 to index
    %c0_22 = arith.constant 0 : index
    %54 = vector.load %arg11[%53, %c0_22] : memref<8x32xf32, #tpu.memory_space<vmem>>, vector<1x32xf32>
    tpu.vector_store %arg11[%53, %c0_22], %52 {strides = array<i32>} : memref<8x32xf32, #tpu.memory_space<vmem>>, vector<1x32xf32>,
    %c6_i32 = arith.constant 6 : i32
    %c1_i32_23 = arith.constant 1 : i32
    %55 = arith.muli %c6_i32, %c1_i32_23 : i32
    %c0_i32_24 = arith.constant 0 : i32
    %56 = arith.addi %c0_i32_24, %55 : i32
    %57 = arith.addi %0, %56 : i32
    %58 = arith.index_cast %57 : i32 to index
    %59 = memref.load %arg1[%58] : memref<8xi32, #tpu.memory_space<smem>>
    %60 = arith.index_cast %59 : i32 to index
    %c0_25 = arith.constant 0 : index
    %61 = vector.load %arg2[%60, %c0_25] : memref<10000x32xf32, #tpu.memory_space<vmem>>, vector<1x32xf32>
    %62 = arith.index_cast %56 : i32 to index
    %c0_26 = arith.constant 0 : index
    %63 = vector.load %arg11[%62, %c0_26] : memref<8x32xf32, #tpu.memory_space<vmem>>, vector<1x32xf32>
    tpu.vector_store %arg11[%62, %c0_26], %61 {strides = array<i32>} : memref<8x32xf32, #tpu.memory_space<vmem>>, vector<1x32xf32>,
    %c7_i32 = arith.constant 7 : i32
    %c1_i32_27 = arith.constant 1 : i32
    %64 = arith.muli %c7_i32, %c1_i32_27 : i32
    %c0_i32_28 = arith.constant 0 : i32
    %65 = arith.addi %c0_i32_28, %64 : i32
    %66 = arith.addi %0, %65 : i32
    %67 = arith.index_cast %66 : i32 to index
    %68 = memref.load %arg1[%67] : memref<8xi32, #tpu.memory_space<smem>>
    %69 = arith.index_cast %68 : i32 to index
    %c0_29 = arith.constant 0 : index
    %70 = vector.load %arg2[%69, %c0_29] : memref<10000x32xf32, #tpu.memory_space<vmem>>, vector<1x32xf32>
    %71 = arith.index_cast %65 : i32 to index
    %c0_30 = arith.constant 0 : index
    %72 = vector.load %arg11[%71, %c0_30] : memref<8x32xf32, #tpu.memory_space<vmem>>, vector<1x32xf32>
    tpu.vector_store %arg11[%71, %c0_30], %70 {strides = array<i32>} : memref<8x32xf32, #tpu.memory_space<vmem>>, vector<1x32xf32>,
    %c8_i32_31 = arith.constant 8 : i32
    %c0_32 = arith.constant 0 : index
    %c0_33 = arith.constant 0 : index
    %73 = vector.load %arg11[%c0_32, %c0_33] : memref<8x32xf32, #tpu.memory_space<vmem>>, vector<8x32xf32>
    %c0_34 = arith.constant 0 : index
    %c0_35 = arith.constant 0 : index
    %74 = vector.load %arg3[%c0_34, %c0_35] : memref<1x32xf32, #tpu.memory_space<vmem>>, vector<1x32xf32>
    %75 = vector.broadcast %74 : vector<1x32xf32> to vector<8x32xf32>
    %76 = arith.addf %73, %75 : vector<8x32xf32>
    %cst = arith.constant 0.000000e+00 : f32
    %77 = vector.broadcast %cst : f32 to vector<8x32xf32>
    %78 = arith.maximumf %76, %77 : vector<8x32xf32>
    %c0_36 = arith.constant 0 : index
    %c0_37 = arith.constant 0 : index
    %79 = vector.load %arg4[%c0_36, %c0_37] : memref<32x32xf32, #tpu.memory_space<vmem>>, vector<32x32xf32>
    %cst_38 = arith.constant dense<0.000000e+00> : vector<8x32xf32>
    %80 = tpu.matmul %78, %79, %cst_38 {dimension_numbers = #tpu.dot_dimension_numbers<[1], [0], [0], [1], [0, 0, 1, 1], [], []>} : vector<8x32xf32>, vector<32x32xf32>, vector<8x32xf32> -> vector<8x32xf32>
    %c0_39 = arith.constant 0 : index
    %c0_40 = arith.constant 0 : index
    %81 = vector.load %arg5[%c0_39, %c0_40] : memref<1x32xf32, #tpu.memory_space<vmem>>, vector<1x32xf32>
    %82 = vector.broadcast %81 : vector<1x32xf32> to vector<8x32xf32>
    %83 = arith.addf %80, %82 : vector<8x32xf32>
    %cst_41 = arith.constant 0.000000e+00 : f32
    %84 = vector.broadcast %cst_41 : f32 to vector<8x32xf32>
    %85 = arith.maximumf %83, %84 : vector<8x32xf32>
    %c0_42 = arith.constant 0 : index
    %c0_43 = arith.constant 0 : index
    %86 = vector.load %arg6[%c0_42, %c0_43] : memref<32x32xf32, #tpu.memory_space<vmem>>, vector<32x32xf32>
    %cst_44 = arith.constant dense<0.000000e+00> : vector<8x32xf32>
    %87 = tpu.matmul %85, %86, %cst_44 {dimension_numbers = #tpu.dot_dimension_numbers<[1], [0], [0], [1], [0, 0, 1, 1], [], []>} : vector<8x32xf32>, vector<32x32xf32>, vector<8x32xf32> -> vector<8x32xf32>
    %c0_45 = arith.constant 0 : index
    %c0_46 = arith.constant 0 : index
    %88 = vector.load %arg7[%c0_45, %c0_46] : memref<1x32xf32, #tpu.memory_space<vmem>>, vector<1x32xf32>
    %89 = vector.broadcast %88 : vector<1x32xf32> to vector<8x32xf32>
    %90 = arith.addf %87, %89 : vector<8x32xf32>
    %cst_47 = arith.constant 0.000000e+00 : f32
    %91 = vector.broadcast %cst_47 : f32 to vector<8x32xf32>
    %92 = arith.maximumf %90, %91 : vector<8x32xf32>
    %c0_48 = arith.constant 0 : index
    %c0_49 = arith.constant 0 : index
    %93 = vector.load %arg8[%c0_48, %c0_49] : memref<32x128xf32, #tpu.memory_space<vmem>>, vector<32x128xf32>
    %cst_50 = arith.constant dense<0.000000e+00> : vector<8x128xf32>
    %94 = tpu.matmul %92, %93, %cst_50 {dimension_numbers = #tpu.dot_dimension_numbers<[1], [0], [0], [1], [0, 0, 1, 1], [], []>} : vector<8x32xf32>, vector<32x128xf32>, vector<8x128xf32> -> vector<8x128xf32>
    %c0_51 = arith.constant 0 : index
    %c0_52 = arith.constant 0 : index
    %95 = vector.load %arg9[%c0_51, %c0_52] : memref<1x128xf32, #tpu.memory_space<vmem>>, vector<1x128xf32>
    %96 = vector.broadcast %95 : vector<1x128xf32> to vector<8x128xf32>
    %97 = arith.addf %94, %96 : vector<8x128xf32>
    %c0_53 = arith.constant 0 : index
    %c0_54 = arith.constant 0 : index
    %98 = vector.load %arg10[%c0_53, %c0_54] : memref<8x128xf32, #tpu.memory_space<vmem>>, vector<8x128xf32>
    tpu.vector_store %arg10[%c0_53, %c0_54], %97 {strides = array<i32>} : memref<8x128xf32, #tpu.memory_space<vmem>>, vector<8x128xf32>,
    return
  }
  func.func @transform_0(%arg0: i32, %arg1: memref<8xi32, #tpu.memory_space<smem>>) -> (i32, i32) {
    %c0_i32 = arith.constant 0 : i32
    %c0_i32_0 = arith.constant 0 : i32
    %c0_i32_1 = arith.constant 0 : i32
    return %c0_i32, %c0_i32_0 : i32, i32
  }
  func.func @transform_1(%arg0: i32, %arg1: memref<8xi32, #tpu.memory_space<smem>>) -> (i32, i32) {
    %c0_i32 = arith.constant 0 : i32
    %c0_i32_0 = arith.constant 0 : i32
    %c0_i32_1 = arith.constant 0 : i32
    return %c0_i32, %c0_i32_0 : i32, i32
  }
  func.func @transform_2(%arg0: i32, %arg1: memref<8xi32, #tpu.memory_space<smem>>) -> (i32, i32) {
    %c0_i32 = arith.constant 0 : i32
    %c0_i32_0 = arith.constant 0 : i32
    %c0_i32_1 = arith.constant 0 : i32
    return %c0_i32, %c0_i32_0 : i32, i32
  }
  func.func @transform_3(%arg0: i32, %arg1: memref<8xi32, #tpu.memory_space<smem>>) -> (i32, i32) {
    %c0_i32 = arith.constant 0 : i32
    %c0_i32_0 = arith.constant 0 : i32
    %c0_i32_1 = arith.constant 0 : i32
    return %c0_i32, %c0_i32_0 : i32, i32
  }
  func.func @transform_4(%arg0: i32, %arg1: memref<8xi32, #tpu.memory_space<smem>>) -> (i32, i32) {
    %c0_i32 = arith.constant 0 : i32
    %c0_i32_0 = arith.constant 0 : i32
    %c0_i32_1 = arith.constant 0 : i32
    return %c0_i32, %c0_i32_0 : i32, i32
  }
  func.func @transform_5(%arg0: i32, %arg1: memref<8xi32, #tpu.memory_space<smem>>) -> (i32, i32) {
    %c0_i32 = arith.constant 0 : i32
    %c0_i32_0 = arith.constant 0 : i32
    %c0_i32_1 = arith.constant 0 : i32
    return %c0_i32, %c0_i32_0 : i32, i32
  }
  func.func @transform_6(%arg0: i32, %arg1: memref<8xi32, #tpu.memory_space<smem>>) -> (i32, i32) {
    %c0_i32 = arith.constant 0 : i32
    %c0_i32_0 = arith.constant 0 : i32
    %c0_i32_1 = arith.constant 0 : i32
    return %c0_i32, %c0_i32_0 : i32, i32
  }
  func.func @transform_7(%arg0: i32, %arg1: memref<8xi32, #tpu.memory_space<smem>>) -> (i32, i32) {
    %c0_i32 = arith.constant 0 : i32
    %c0_i32_0 = arith.constant 0 : i32
    %c0_i32_1 = arith.constant 0 : i32
    return %c0_i32, %c0_i32_0 : i32, i32
  }
  func.func @transform_8(%arg0: i32, %arg1: memref<8xi32, #tpu.memory_space<smem>>) -> (i32, i32) {
    %c0_i32 = arith.constant 0 : i32
    %c0_i32_0 = arith.constant 0 : i32
    return %arg0, %c0_i32 : i32, i32
  }
}

</mosaic_0001>

<llo_original>
// kernel: tpu_custom_call.1
$region0: #{tpu_custom_call.1}
  #allocation0 [shape = 'u32[]', space=smem, size = 0x4, offset = 0x4, fixed_abs, tag = 'smem constant byte address 0x4 - core index']
  #allocation1 [shape = 'u32[144,128]{1,0:T(1,128)}', space=vmem, size = 0x12000, scoped, tag = 'internal scratch']
  #allocation2 [shape = 'f32[8,32]{1,0:T(8,128)}', space=vmem, size = 0x1000, scoped, tag = 'scratch operand']
  #allocation3 [shape = 's32[1]{0}', space=sflag, size = 0x4, scoped, tag = 'scoped memory for tpu_custom_call.1']
  #allocation4 [shape = 'u8[512]{0}', space=smem, size = 0x200, scoped, tag = 'prefetched SMEM operand 0']
  %s0 = inlined_call_operand.vmem [shape: s32[8], index: 0, kind: input, shape index: {}]
  %s1 = inlined_call_operand.vmem [shape: f32[10000,32], index: 1, kind: input, shape index: {}]
  %s2 = inlined_call_operand.vmem [shape: f32[1,32], index: 2, kind: input, shape index: {}]
  %s3 = inlined_call_operand.vmem [shape: f32[32,32], index: 3, kind: input, shape index: {}]
  %s4 = inlined_call_operand.vmem [shape: f32[1,32], index: 4, kind: input, shape index: {}]
  %s5 = inlined_call_operand.vmem [shape: f32[32,32], index: 5, kind: input, shape index: {}]
  %s6 = inlined_call_operand.vmem [shape: f32[1,32], index: 6, kind: input, shape index: {}]
  %s7 = inlined_call_operand.vmem [shape: f32[32,128], index: 7, kind: input, shape index: {}]
  %s8 = inlined_call_operand.vmem [shape: f32[1,128], index: 8, kind: input, shape index: {}]
  %s9 = inlined_call_operand.hbm [shape: f32[8,128], index: 9, kind: output, shape index: {}]
  %s10 = sld [smem:[#allocation0]]
  $region42: #{tpu_custom_call.1} parent=0
    _
  %s12 = ssub.s32 1, %s10
  %s13 = scalar_select 0, %s12, %s10
  %s14 = sshll.u32 %s0, 4
  %s15 = int_to_ptr.vmem [resolvable:$true] %s14
  %17 = dma.vmem_to_smem %s15, 16, [#allocation4], [#allocation3]
  %18 = dma.done [#allocation3], 16
  %19 = sfence
  $region1: #{tpu_custom_call.1} parent=0
    #allocation5 [shape = 'u8[4096]{0}', space=vmem, size = 0x1000, scoped, tag = 'output window, operand 0, single buffered']
    #allocation6 [shape = 's32[1]{0}', space=sflag, size = 0x4, scoped, tag = 'scoped memory for tpu_custom_call.1']
    %20 = vsyncpa [#allocation6], 0
    // Predicated region
    $region2: #{tpu_custom_call.1} parent=1 // pred_check
      _
    $region3: #{tpu_custom_call.1} parent=1 // pred_check_branch
      %22 = sbr.rel (0) target = $region5
    $region4: #{tpu_custom_call.1} parent=1 // pred_region
      _
    $region5: #{tpu_custom_call.1} parent=1 // pred_fallthru
      _
    // Predicated region
    $region6: #{tpu_custom_call.1} parent=1 // pred_check
      _
    $region7: #{tpu_custom_call.1} parent=1 // pred_check_branch
      %24 = sbr.rel (0) target = $region9
    $region8: #{tpu_custom_call.1} parent=1 // pred_region
      _
    $region9: #{tpu_custom_call.1} parent=1 // pred_fallthru
      _
    // Predicated region
    $region10: #{tpu_custom_call.1} parent=1 // pred_check
      _
    $region11: #{tpu_custom_call.1} parent=1 // pred_check_branch
      %26 = sbr.rel (0) target = $region13
    $region12: #{tpu_custom_call.1} parent=1 // pred_region
      _
    $region13: #{tpu_custom_call.1} parent=1 // pred_fallthru
      _
    // Predicated region
    $region14: #{tpu_custom_call.1} parent=1 // pred_check
      _
    $region15: #{tpu_custom_call.1} parent=1 // pred_check_branch
      %28 = sbr.rel (0) target = $region17
    $region16: #{tpu_custom_call.1} parent=1 // pred_region
      _
    $region17: #{tpu_custom_call.1} parent=1 // pred_fallthru
      _
    // Predicated region
    $region18: #{tpu_custom_call.1} parent=1 // pred_check
      _
    $region19: #{tpu_custom_call.1} parent=1 // pred_check_branch
      %30 = sbr.rel (0) target = $region21
    $region20: #{tpu_custom_call.1} parent=1 // pred_region
      _
    $region21: #{tpu_custom_call.1} parent=1 // pred_fallthru
      _
    // Predicated region
    $region22: #{tpu_custom_call.1} parent=1 // pred_check
      _
    $region23: #{tpu_custom_call.1} parent=1 // pred_check_branch
      %32 = sbr.rel (0) target = $region25
    $region24: #{tpu_custom_call.1} parent=1 // pred_region
      _
    $region25: #{tpu_custom_call.1} parent=1 // pred_fallthru
      _
    // Predicated region
    $region26: #{tpu_custom_call.1} parent=1 // pred_check
      _
    $region27: #{tpu_custom_call.1} parent=1 // pred_check_branch
      %34 = sbr.rel (0) target = $region29
    $region28: #{tpu_custom_call.1} parent=1 // pred_region
      _
    $region29: #{tpu_custom_call.1} parent=1 // pred_fallthru
      _
    // Predicated region
    $region30: #{tpu_custom_call.1} parent=1 // pred_check
      _
    $region31: #{tpu_custom_call.1} parent=1 // pred_check_branch
      %36 = sbr.rel (0) target = $region33
    $region32: #{tpu_custom_call.1} parent=1 // pred_region
      _
    $region33: #{tpu_custom_call.1} parent=1 // pred_fallthru
      _
    %s37 = smul.u32 0, 8
    %s38 = sld [smem:[#allocation4 + %s37]]
    %s39 = scalar_lea.vmem %s1, %s38
    %v40 = vld [vmem:[%s39] sm:$0x1]
    %vm41 = vcmask 253952
    %42 = vst.msk [vmem:[#allocation2] sm:$0x1] %vm41, %v40
    %s43 = sadd.s32 %s37, 1
    %s44 = sld [smem:[#allocation4 + %s43]]
    %s45 = scalar_lea.vmem %s1, %s44
    %v46 = vld [vmem:[%s45] sm:$0x1]
    %47 = vst.msk [vmem:[#allocation2 + $0x1] sm:$0x1] %vm41, %v46
    %s48 = sadd.s32 %s37, 2
    %s49 = sld [smem:[#allocation4 + %s48]]
    %s50 = scalar_lea.vmem %s1, %s49
    %v51 = vld [vmem:[%s50] sm:$0x1]
    %52 = vst.msk [vmem:[#allocation2 + $0x2] sm:$0x1] %vm41, %v51
    %s53 = sadd.s32 %s37, 3
    %s54 = sld [smem:[#allocation4 + %s53]]
    %s55 = scalar_lea.vmem %s1, %s54
    %v56 = vld [vmem:[%s55] sm:$0x1]
    %57 = vst.msk [vmem:[#allocation2 + $0x3] sm:$0x1] %vm41, %v56
    %s58 = sadd.s32 %s37, 4
    %s59 = sld [smem:[#allocation4 + %s58]]
    %s60 = scalar_lea.vmem %s1, %s59
    %v61 = vld [vmem:[%s60] sm:$0x1]
    %62 = vst.msk [vmem:[#allocation2 + $0x4] sm:$0x1] %vm41, %v61
    %s63 = sadd.s32 %s37, 5
    %s64 = sld [smem:[#allocation4 + %s63]]
    %s65 = scalar_lea.vmem %s1, %s64
    %v66 = vld [vmem:[%s65] sm:$0x1]
    %67 = vst.msk [vmem:[#allocation2 + $0x5] sm:$0x1] %vm41, %v66
    %s68 = sadd.s32 %s37, 6
    %s69 = sld [smem:[#allocation4 + %s68]]
    %s70 = scalar_lea.vmem %s1, %s69
    %v71 = vld [vmem:[%s70] sm:$0x1]
    %72 = vst.msk [vmem:[#allocation2 + $0x6] sm:$0x1] %vm41, %v71
    %s73 = sadd.s32 %s37, 7
    %s74 = sld [smem:[#allocation4 + %s73]]
    %s75 = scalar_lea.vmem %s1, %s74
    %v76 = vld [vmem:[%s75] sm:$0x1]
    %77 = vst.msk [vmem:[#allocation2 + $0x7] sm:$0x1] %vm41, %v76
    %v78 = vld [vmem:[#allocation2] sm:$0xff]
    %v79 = vld [vmem:[%s2] sm:$0x1]
    %v81 = vlaneseq
    %v82 = vshrl.u32 %v81, 7
    %v83 = vsub.s32 0, %v82
    %v84 = vrot.slane %v79, %v83
    %v86 = vadd.f32 %v78, %v84
    %v87 = vmax.f32 %v86, 0.0
    %v88 = vld [vmem:[%s3] sm:$0xff]
    %v89 = vld [vmem:[%s3 + $0x8] sm:$0xff]
    %v90 = vld [vmem:[%s3 + $0x10] sm:$0xff]
    %v91 = vld [vmem:[%s3 + $0x18] sm:$0xff]
    %v92 = vld [vmem:[%s4] sm:$0x1]
    %v94 = vlaneseq
    %v95 = vshrl.u32 %v94, 7
    %v96 = vsub.s32 0, %v95
    %v97 = vrot.slane %v92, %v96
    %vm99 = vcmask 261120
    %v101 = vsel %vm99, %v87, 0
    %103 = vmatprep.subr.mxu0 0.0
    %104 = vmatpush1.msra.mxu0 0.0
    %105 = vmatprep.subr.mxu0 0.0
    %106 = vmatpush1.msra.mxu0 0.0
    %107 = vmatprep.subr.mxu0 0.0
    %108 = vmatpush1.msra.mxu0 0.0
    %109 = vmatprep.subr.mxu0 0.0
    %110 = vmatpush1.msra.mxu0 0.0
    %111 = vmatprep.subr.mxu0 0.0
    %112 = vmatpush1.msra.mxu0 0.0
    %113 = vmatprep.subr.mxu0 0.0
    %114 = vmatpush1.msra.mxu0 0.0
    %115 = vmatprep.subr.mxu0 0.0
    %116 = vmatpush1.msra.mxu0 0.0
    %117 = vmatprep.subr.mxu0 0.0
    %118 = vmatpush1.msra.mxu0 0.0
    %119 = vmatprep.subr.mxu0 0.0
    %120 = vmatpush1.msra.mxu0 0.0
    %121 = vmatprep.subr.mxu0 0.0
    %122 = vmatpush1.msra.mxu0 0.0
    %123 = vmatprep.subr.mxu0 0.0
    %124 = vmatpush1.msra.mxu0 0.0
    %125 = vmatprep.subr.mxu0 0.0
    %126 = vmatpush1.msra.mxu0 0.0
    %127 = vmatprep.subr.mxu0 0.0
    %128 = vmatpush1.msra.mxu0 %v91
    %129 = vmatprep.subr.mxu0 0.0
    %130 = vmatpush1.msra.mxu0 %v90
    %131 = vmatprep.subr.mxu0 0.0
    %132 = vmatpush1.msra.mxu0 %v89
    %133 = vmatprep.subr.mxu0 0.0
    %134 = vmatpush1.msra.mxu0 %v88
    %135 = vmatprep.subr.mxu0 0.0
    %136 = vmatpush2.msra.mxu0 0.0
    %137 = vmatprep.subr.mxu0 0.0
    %138 = vmatpush2.msra.mxu0 0.0
    %139 = vmatprep.subr.mxu0 0.0
    %140 = vmatpush2.msra.mxu0 0.0
    %141 = vmatprep.subr.mxu0 0.0
    %142 = vmatpush2.msra.mxu0 0.0
    %143 = vmatprep.subr.mxu0 0.0
    %144 = vmatpush2.msra.mxu0 0.0
    %145 = vmatprep.subr.mxu0 0.0
    %146 = vmatpush2.msra.mxu0 0.0
    %147 = vmatprep.subr.mxu0 0.0
    %148 = vmatpush2.msra.mxu0 0.0
    %149 = vmatprep.subr.mxu0 0.0
    %150 = vmatpush2.msra.mxu0 0.0
    %151 = vmatprep.subr.mxu0 0.0
    %152 = vmatpush2.msra.mxu0 0.0
    %153 = vmatprep.subr.mxu0 0.0
    %154 = vmatpush2.msra.mxu0 0.0
    %155 = vmatprep.subr.mxu0 0.0
    %156 = vmatpush2.msra.mxu0 0.0
    %157 = vmatprep.subr.mxu0 0.0
    %158 = vmatpush2.msra.mxu0 0.0
    %159 = vmatprep.subr.mxu0 0.0
    %160 = vmatpush2.msra.mxu0 0.0
    %161 = vmatprep.subr.mxu0 0.0
    %162 = vmatpush2.msra.mxu0 0.0
    %163 = vmatprep.subr.mxu0 0.0
    %164 = vmatpush2.msra.mxu0 0.0
    %165 = vmatprep.subr.mxu0 0.0
    %166 = vmatpush2.msra.mxu0 0.0
    %167 = vmatprep.mubr.f32.mxu0 0.0
    %168 = vmatmul.mubr.f32.gmra.mxu0 %v101
    %v169 = vpop.f32.mrf.mxu0
    %v170 = vadd.f32 %v97, %v169
    %v171 = vpop.f32.mrf.mxu0
    %172 = vdwg.mxu0
    %v173 = vmax.f32 %v170, 0.0
    %v174 = vld [vmem:[%s5] sm:$0xff]
    %v175 = vld [vmem:[%s5 + $0x8] sm:$0xff]
    %v176 = vld [vmem:[%s5 + $0x10] sm:$0xff]
    %v177 = vld [vmem:[%s5 + $0x18] sm:$0xff]
    %v178 = vld [vmem:[%s6] sm:$0x1]
    %v180 = vlaneseq
    %v181 = vshrl.u32 %v180, 7
    %v182 = vsub.s32 0, %v181
    %v183 = vrot.slane %v178, %v182
    %v186 = vsel %vm99, %v173, 0
    %188 = vmatprep.subr.mxu0 0.0
    %189 = vmatpush1.msra.mxu0 0.0
    %190 = vmatprep.subr.mxu0 0.0
    %191 = vmatpush1.msra.mxu0 0.0
    %192 = vmatprep.subr.mxu0 0.0
    %193 = vmatpush1.msra.mxu0 0.0
    %194 = vmatprep.subr.mxu0 0.0
    %195 = vmatpush1.msra.mxu0 0.0
    %196 = vmatprep.subr.mxu0 0.0
    %197 = vmatpush1.msra.mxu0 0.0
    %198 = vmatprep.subr.mxu0 0.0
    %199 = vmatpush1.msra.mxu0 0.0
    %200 = vmatprep.subr.mxu0 0.0
    %201 = vmatpush1.msra.mxu0 0.0
    %202 = vmatprep.subr.mxu0 0.0
    %203 = vmatpush1.msra.mxu0 0.0
    %204 = vmatprep.subr.mxu0 0.0
    %205 = vmatpush1.msra.mxu0 0.0
    %206 = vmatprep.subr.mxu0 0.0
    %207 = vmatpush1.msra.mxu0 0.0
    %208 = vmatprep.subr.mxu0 0.0
    %209 = vmatpush1.msra.mxu0 0.0
    %210 = vmatprep.subr.mxu0 0.0
    %211 = vmatpush1.msra.mxu0 0.0
    %212 = vmatprep.subr.mxu0 0.0
    %213 = vmatpush1.msra.mxu0 %v177
    %214 = vmatprep.subr.mxu0 0.0
    %215 = vmatpush1.msra.mxu0 %v176
    %216 = vmatprep.subr.mxu0 0.0
    %217 = vmatpush1.msra.mxu0 %v175
    %218 = vmatprep.subr.mxu0 0.0
    %219 = vmatpush1.msra.mxu0 %v174
    %220 = vmatprep.subr.mxu0 0.0
    %221 = vmatpush2.msra.mxu0 0.0
    %222 = vmatprep.subr.mxu0 0.0
    %223 = vmatpush2.msra.mxu0 0.0
    %224 = vmatprep.subr.mxu0 0.0
    %225 = vmatpush2.msra.mxu0 0.0
    %226 = vmatprep.subr.mxu0 0.0
    %227 = vmatpush2.msra.mxu0 0.0
    %228 = vmatprep.subr.mxu0 0.0
    %229 = vmatpush2.msra.mxu0 0.0
    %230 = vmatprep.subr.mxu0 0.0
    %231 = vmatpush2.msra.mxu0 0.0
    %232 = vmatprep.subr.mxu0 0.0
    %233 = vmatpush2.msra.mxu0 0.0
    %234 = vmatprep.subr.mxu0 0.0
    %235 = vmatpush2.msra.mxu0 0.0
    %236 = vmatprep.subr.mxu0 0.0
    %237 = vmatpush2.msra.mxu0 0.0
    %238 = vmatprep.subr.mxu0 0.0
    %239 = vmatpush2.msra.mxu0 0.0
    %240 = vmatprep.subr.mxu0 0.0
    %241 = vmatpush2.msra.mxu0 0.0
    %242 = vmatprep.subr.mxu0 0.0
    %243 = vmatpush2.msra.mxu0 0.0
    %244 = vmatprep.subr.mxu0 0.0
    %245 = vmatpush2.msra.mxu0 0.0
    %246 = vmatprep.subr.mxu0 0.0
    %247 = vmatpush2.msra.mxu0 0.0
    %248 = vmatprep.subr.mxu0 0.0
    %249 = vmatpush2.msra.mxu0 0.0
    %250 = vmatprep.subr.mxu0 0.0
    %251 = vmatpush2.msra.mxu0 0.0
    %252 = vmatprep.mubr.f32.mxu0 0.0
    %253 = vmatmul.mubr.f32.gmra.mxu0 %v186
    %v254 = vpop.f32.mrf.mxu0
    %v255 = vadd.f32 %v183, %v254
    %v256 = vpop.f32.mrf.mxu0
    %257 = vdwg.mxu0
    %v258 = vmax.f32 %v255, 0.0
    %v259 = vld [vmem:[%s7] sm:$0xff]
    %v260 = vld [vmem:[%s7 + $0x8] sm:$0xff]
    %v261 = vld [vmem:[%s7 + $0x10] sm:$0xff]
    %v262 = vld [vmem:[%s7 + $0x18] sm:$0xff]
    %v263 = vld [vmem:[%s8] sm:$0x1]
    %v265 = vlaneseq
    %v266 = vshrl.u32 %v265, 7
    %v267 = vsub.s32 0, %v266
    %v268 = vrot.slane %v263, %v267
    %v271 = vsel %vm99, %v258, 0
    %273 = vmatprep.subr.mxu0 0.0
    %274 = vmatpush1.msra.mxu0 0.0
    %275 = vmatprep.subr.mxu0 0.0
    %276 = vmatpush1.msra.mxu0 0.0
    %277 = vmatprep.subr.mxu0 0.0
    %278 = vmatpush1.msra.mxu0 0.0
    %279 = vmatprep.subr.mxu0 0.0
    %280 = vmatpush1.msra.mxu0 0.0
    %281 = vmatprep.subr.mxu0 0.0
    %282 = vmatpush1.msra.mxu0 0.0
    %283 = vmatprep.subr.mxu0 0.0
    %284 = vmatpush1.msra.mxu0 0.0
    %285 = vmatprep.subr.mxu0 0.0
    %286 = vmatpush1.msra.mxu0 0.0
    %287 = vmatprep.subr.mxu0 0.0
    %288 = vmatpush1.msra.mxu0 0.0
    %289 = vmatprep.subr.mxu0 0.0
    %290 = vmatpush1.msra.mxu0 0.0
    %291 = vmatprep.subr.mxu0 0.0
    %292 = vmatpush1.msra.mxu0 0.0
    %293 = vmatprep.subr.mxu0 0.0
    %294 = vmatpush1.msra.mxu0 0.0
    %295 = vmatprep.subr.mxu0 0.0
    %296 = vmatpush1.msra.mxu0 0.0
    %297 = vmatprep.subr.mxu0 0.0
    %298 = vmatpush1.msra.mxu0 %v262
    %299 = vmatprep.subr.mxu0 0.0
    %300 = vmatpush1.msra.mxu0 %v261
    %301 = vmatprep.subr.mxu0 0.0
    %302 = vmatpush1.msra.mxu0 %v260
    %303 = vmatprep.subr.mxu0 0.0
    %304 = vmatpush1.msra.mxu0 %v259
    %305 = vmatprep.subr.mxu0 0.0
    %306 = vmatpush2.msra.mxu0 0.0
    %307 = vmatprep.subr.mxu0 0.0
    %308 = vmatpush2.msra.mxu0 0.0
    %309 = vmatprep.subr.mxu0 0.0
    %310 = vmatpush2.msra.mxu0 0.0
    %311 = vmatprep.subr.mxu0 0.0
    %312 = vmatpush2.msra.mxu0 0.0
    %313 = vmatprep.subr.mxu0 0.0
    %314 = vmatpush2.msra.mxu0 0.0
    %315 = vmatprep.subr.mxu0 0.0
    %316 = vmatpush2.msra.mxu0 0.0
    %317 = vmatprep.subr.mxu0 0.0
    %318 = vmatpush2.msra.mxu0 0.0
    %319 = vmatprep.subr.mxu0 0.0
    %320 = vmatpush2.msra.mxu0 0.0
    %321 = vmatprep.subr.mxu0 0.0
    %322 = vmatpush2.msra.mxu0 0.0
    %323 = vmatprep.subr.mxu0 0.0
    %324 = vmatpush2.msra.mxu0 0.0
    %325 = vmatprep.subr.mxu0 0.0
    %326 = vmatpush2.msra.mxu0 0.0
    %327 = vmatprep.subr.mxu0 0.0
    %328 = vmatpush2.msra.mxu0 0.0
    %329 = vmatprep.subr.mxu0 0.0
    %330 = vmatpush2.msra.mxu0 0.0
    %331 = vmatprep.subr.mxu0 0.0
    %332 = vmatpush2.msra.mxu0 0.0
    %333 = vmatprep.subr.mxu0 0.0
    %334 = vmatpush2.msra.mxu0 0.0
    %335 = vmatprep.subr.mxu0 0.0
    %336 = vmatpush2.msra.mxu0 0.0
    %337 = vmatprep.mubr.f32.mxu0 0.0
    %338 = vmatmul.mubr.f32.gmra.mxu0 %v271
    %v339 = vpop.f32.mrf.mxu0
    %v340 = vadd.f32 %v268, %v339
    %v341 = vpop.f32.mrf.mxu0
    %342 = vdwg.mxu0
    %343 = vst [vmem:[#allocation5] sm:$0xff] %v340
    // Predicated region
    $region34: #{tpu_custom_call.1} parent=1 // pred_check
      _
    $region35: #{tpu_custom_call.1} parent=1 // pred_check_branch
      %345 = sbr.rel (0) target = $region37
    $region36: #{tpu_custom_call.1} parent=1 // pred_region
      %s347 = ssub.s32 128, 128
      %348 = vsyncadd [#allocation6], %s347
      %s350 = sshll.u32 [#allocation5], 4
      %s351 = int_to_ptr.vmem [resolvable:$true] %s350
      %353 = dma.vmem_to_hbm [thread:$0]  %s351, 128, %s9, [#allocation6]
    $region37: #{tpu_custom_call.1} parent=1 // pred_fallthru
      _
    // Predicated region
    $region38: #{tpu_custom_call.1} parent=1 // pred_check
      _
    $region39: #{tpu_custom_call.1} parent=1 // pred_check_branch
      %355 = sbr.rel (0) target = $region41
    $region40: #{tpu_custom_call.1} parent=1 // pred_region
      %356 = dma.done [#allocation6], 128
    $region41: #{tpu_custom_call.1} parent=1 // pred_fallthru
      _
    %357 = vsyncpa [#allocation6], 1

</llo_original>
